<compile_context>
chip_gen: v7x
topology: tpu7x:2x2x1
jax: 0.10.0
libtpu: 0.0.40
codegen_flags: <defaults>
</compile_context>

<pallas_src>
import functools

import jax
import jax.numpy as jnp
from jax.experimental import pallas as pl
from jax.experimental.pallas import tpu as pltpu


_PIPELINE_VMEM_BUDGET = 24 * 1024 * 1024   # double-buffered input tiles; safe on v7x's 64 MiB VMEM/TC
_VMEM_LIMIT_BYTES = 48 * 1024 * 1024       # scoped VMEM limit handed to Mosaic (headroom on every generation)
_MAX_BLOCK_ROWS = 8192                     # 8192x128 f32 x3 inputs x2 bufs = 24 MiB; per-step overhead < 4%
_CONF_THRESH = 0.01
_TINY_BYTES = 256 * 1024                   # below this, XLA's fused elementwise+reduce beats a kernel launch


def _kp_loss_kernel(*refs, has_conf, n_rows, block_rows, needs_row_mask):
    if has_conf:
        pred_ref, gt_ref, conf_ref, sum_ref, cnt_ref = refs
    else:
        pred_ref, gt_ref, sum_ref = refs
        conf_ref = None
        cnt_ref = None

    i = pl.program_id(0)

    @pl.when(i == 0)
    def _():
        sum_ref[...] = jnp.zeros_like(sum_ref)
        if has_conf:
            cnt_ref[...] = jnp.zeros_like(cnt_ref)

    pred = pred_ref[...].astype(jnp.float32)
    gt = gt_ref[...].astype(jnp.float32)
    diff = pred - gt
    sq = diff * diff                                             # (TB, L) squared error, f32

    # Fused mask: confidence threshold (if any) AND validity of padded rows in a
    # partial last tile.  jnp.where (not multiply) so garbage in OOB padding can't
    # poison the sum with NaN/Inf.
    keep = None
    if has_conf:
        keep = conf_ref[...].astype(jnp.float32) >= jnp.float32(_CONF_THRESH)
    if needs_row_mask:
        row = jax.lax.broadcasted_iota(jnp.int32, sq.shape, 0) + i * block_rows
        in_bounds = row < n_rows
        keep = in_bounds if keep is None else jnp.logical_and(keep, in_bounds)

    if keep is not None:
        sq = jnp.where(keep, sq, jnp.float32(0.0))

    # Sublane-only reduce per step; the 128-wide lane reduce happens once, outside.
    sum_ref[...] += jnp.sum(sq, axis=0, keepdims=True)

    if has_conf:
        # Per-block per-lane count <= block_rows (< 2^24) so the f32 reduce is exact;
        # the running per-lane total is kept in int32 so it stays exact for any size.
        m = keep.astype(jnp.float32)
        cnt_ref[...] += jnp.sum(m, axis=0, keepdims=True).astype(jnp.int32)


def _sublane_multiple(*dtypes):
    # Native sublane tiling: 8 for 4-byte dtypes, 16 for 2-byte, 32 for 1-byte.
    itemsize = min(jnp.dtype(d).itemsize for d in dtypes)
    return 8 * max(1, 4 // itemsize)


def _choose_block_rows(n_rows, row_bytes, sub):
    # row_bytes already sums all pipelined inputs; x2 for double buffering.
    tb = _PIPELINE_VMEM_BUDGET // max(1, 2 * row_bytes)
    tb = max(sub, min(tb, _MAX_BLOCK_ROWS))
    tb = (tb // sub) * sub
    if n_rows < sub:
        return n_rows                      # block rows == full dim (allowed by the (8,128) rule)
    if n_rows <= tb:
        return n_rows if n_rows % sub == 0 else (n_rows // sub) * sub
    return tb


def _keypoint_loss_ref(pred_seq, gt_seq, gt_conf=None):
    """Pure-jnp reference (also used as the tiny-input fast path)."""
    pred = pred_seq.astype(jnp.float32)
    gt = gt_seq.astype(jnp.float32)
    sq = (pred - gt) ** 2
    if gt_conf is None:
        return jnp.mean(sq)
    conf = gt_conf
    if conf.shape != pred.shape:
        conf = jnp.broadcast_to(
            conf.reshape(conf.shape + (1,) * (pred.ndim - conf.ndim)), pred.shape)
    m = (conf.astype(jnp.float32) >= jnp.float32(_CONF_THRESH)).astype(jnp.float32)
    return jnp.sum(sq * m) / jnp.sum(m)


def keypoint_loss(pred_seq, gt_seq, gt_conf=None, *, force_pallas=False):
    """Scalar f32 equal to KeypointLoss()(pred_seq, gt_seq, gt_conf)."""
    assert pred_seq.shape == gt_seq.shape, (pred_seq.shape, gt_seq.shape)

    conf = None
    if gt_conf is not None:
        conf = gt_conf
        if conf.shape != pred_seq.shape:
            # torch boolean prefix-mask indexing == broadcasting the mask over trailing dims.
            assert conf.shape == pred_seq.shape[: conf.ndim], (conf.shape, pred_seq.shape)
            conf = jnp.broadcast_to(
                conf.reshape(conf.shape + (1,) * (pred_seq.ndim - conf.ndim)),
                pred_seq.shape,
            )
            # TODO(synk): stream the un-broadcast conf and expand in-kernel to save HBM traffic.

    # Tiny-input fast path: kernel launch + one grid step dwarfs the work.
    n_in = 3 if conf is not None else 2
    in_bytes = pred_seq.size * n_in * jnp.dtype(pred_seq.dtype).itemsize
    if not force_pallas and in_bytes < _TINY_BYTES:
        return _keypoint_loss_ref(pred_seq, gt_seq, gt_conf)

    # Lane-dense 2-D view: (rows, 128) when possible, else (rows, last_dim).
    total = pred_seq.size
    lanes = 128 if total % 128 == 0 else pred_seq.shape[-1]
    n_rows = total // lanes

    inputs = [pred_seq.reshape(n_rows, lanes), gt_seq.reshape(n_rows, lanes)]
    if conf is not None:
        inputs.append(conf.reshape(n_rows, lanes))

    sub = _sublane_multiple(*(x.dtype for x in inputs))
    row_bytes = lanes * sum(jnp.dtype(x.dtype).itemsize for x in inputs)
    tb = _choose_block_rows(n_rows, row_bytes, sub)
    grid = (pl.cdiv(n_rows, tb),)
    needs_row_mask = grid[0] * tb != n_rows

    has_conf = conf is not None
    kernel = functools.partial(
        _kp_loss_kernel,
        has_conf=has_conf,
        n_rows=n_rows,
        block_rows=tb,
        needs_row_mask=needs_row_mask,
    )

    in_specs = [pl.BlockSpec((tb, lanes), lambda i: (i, 0)) for _ in inputs]
    out_spec = pl.BlockSpec((1, lanes), lambda i: (0, 0))   # VMEM-resident accumulator

    if has_conf:
        out_specs = (out_spec, out_spec)
        out_shape = (
            jax.ShapeDtypeStruct((1, lanes), jnp.float32),   # per-lane sum of squared error
            jax.ShapeDtypeStruct((1, lanes), jnp.int32),     # per-lane selected-element count
        )
    else:
        out_specs = out_spec
        out_shape = jax.ShapeDtypeStruct((1, lanes), jnp.float32)

    out = pl.pallas_call(
        kernel,
        grid=grid,
        in_specs=in_specs,
        out_specs=out_specs,
        out_shape=out_shape,
        compiler_params=pltpu.CompilerParams(
            dimension_semantics=("arbitrary",),   # output block index is constant across the grid
            vmem_limit_bytes=_VMEM_LIMIT_BYTES,
        ),
    )(*inputs)

    if has_conf:
        sse_lanes, cnt_lanes = out
        sse = jnp.sum(sse_lanes)
        cnt = jnp.sum(cnt_lanes)            # exact int32 total
        return sse / cnt
    else:
        sse = jnp.sum(out)
        return sse / jnp.float32(total)     # count is statically known


if __name__ == "__main__":
    key = jax.random.PRNGKey(0)
    k1, k2, k3, k4, k5 = jax.random.split(key, 5)

    # batch=2, seq=8, keypoint-dim=32 (e.g. 16 keypoints x 2 coords)
    B, S, D = 2, 8, 32
    pred = jax.random.normal(k1, (B, S, D), dtype=jnp.float32)
    gt = jax.random.normal(k2, (B, S, D), dtype=jnp.float32)
    # confidences straddling the 0.01 threshold so the mask path is exercised
    conf = jax.random.uniform(k3, (B, S, D), dtype=jnp.float32) * 0.02

    # --- gt_conf path (masked mean MSE) ---
    out_conf = jax.block_until_ready(keypoint_loss(pred, gt, conf, force_pallas=True))
    ref_conf = jax.block_until_ready(_keypoint_loss_ref(pred, gt, conf))
    assert jnp.allclose(out_conf, ref_conf, rtol=1e-5, atol=1e-6), (out_conf, ref_conf)

    # --- plain MSE path ---
    out_plain = jax.block_until_ready(keypoint_loss(pred, gt, force_pallas=True))
    ref_plain = jax.block_until_ready(_keypoint_loss_ref(pred, gt))
    assert jnp.allclose(out_plain, ref_plain, rtol=1e-5, atol=1e-6), (out_plain, ref_plain)

    # --- awkward shape: exercises the partial-last-tile row masking ---
    p2 = jax.random.normal(k4, (2, 9, 3), dtype=jnp.float32)
    g2 = jax.random.normal(k5, (2, 9, 3), dtype=jnp.float32)
    out2 = jax.block_until_ready(keypoint_loss(p2, g2, force_pallas=True))
    ref2 = jax.block_until_ready(_keypoint_loss_ref(p2, g2))
    assert jnp.allclose(out2, ref2, rtol=1e-5, atol=1e-6), (out2, ref2)

    # --- bf16 inputs (halves HBM bytes; math still f32 in-kernel) ---
    out_bf = jax.block_until_ready(
        keypoint_loss(pred.astype(jnp.bfloat16), gt.astype(jnp.bfloat16), force_pallas=True))
    ref_bf = jax.block_until_ready(
        _keypoint_loss_ref(pred.astype(jnp.bfloat16), gt.astype(jnp.bfloat16)))
    assert jnp.allclose(out_bf, ref_bf, rtol=1e-2, atol=1e-3), (out_bf, ref_bf)

    print("KERNEL_OK")
</pallas_src>

<mosaic_0001>
module attributes {stable_mosaic.version = 11 : i64} {
  func.func @_kp_loss_kernel(%arg0: i32, %arg1: memref<4x128xf32, #tpu.memory_space<vmem>>, %arg2: memref<4x128xf32, #tpu.memory_space<vmem>>, %arg3: memref<4x128xf32, #tpu.memory_space<vmem>>, %arg4: memref<1x128xf32, #tpu.memory_space<vmem>>, %arg5: memref<1x128xi32, #tpu.memory_space<vmem>>) attributes {dimension_semantics = [#tpu.dimension_semantics<arbitrary>], iteration_bounds = array<i64: 1>, scalar_prefetch = 0 : i64, scratch_operands = 0 : i64, tpu.core_type = #tpu.core_type<tc>, window_params = [{transform_indices = @transform_0, window_bounds = array<i64: 4, 128>}, {transform_indices = @transform_1, window_bounds = array<i64: 4, 128>}, {transform_indices = @transform_2, window_bounds = array<i64: 4, 128>}, {pipeline_mode = #tpu.pipeline_mode<synchronous>, transform_indices = @transform_3, window_bounds = array<i64: 1, 128>}, {pipeline_mode = #tpu.pipeline_mode<synchronous>, transform_indices = @transform_4, window_bounds = array<i64: 1, 128>}]} {
    %c0_i32 = arith.constant 0 : i32
    %0 = arith.cmpi eq, %arg0, %c0_i32 : i32
    %1 = arith.extui %0 : i1 to i32
    %c0_i32_0 = arith.constant 0 : i32
    %2 = arith.cmpi ne, %1, %c0_i32_0 : i32
    scf.if %2 {
      %cst_17 = arith.constant 0.000000e+00 : f32
      %25 = vector.broadcast %cst_17 : f32 to vector<1x128xf32>
      %c0_18 = arith.constant 0 : index
      %c0_19 = arith.constant 0 : index
      %26 = vector.load %arg4[%c0_18, %c0_19] : memref<1x128xf32, #tpu.memory_space<vmem>>, vector<1x128xf32>
      tpu.vector_store %arg4[%c0_18, %c0_19], %25 {strides = array<i32>} : memref<1x128xf32, #tpu.memory_space<vmem>>, vector<1x128xf32>,
      %c0_i32_20 = arith.constant 0 : i32
      %27 = vector.broadcast %c0_i32_20 : i32 to vector<1x128xi32>
      %c0_21 = arith.constant 0 : index
      %c0_22 = arith.constant 0 : index
      %28 = vector.load %arg5[%c0_21, %c0_22] : memref<1x128xi32, #tpu.memory_space<vmem>>, vector<1x128xi32>
      tpu.vector_store %arg5[%c0_21, %c0_22], %27 {strides = array<i32>} : memref<1x128xi32, #tpu.memory_space<vmem>>, vector<1x128xi32>,
    } else {
    }
    %c0 = arith.constant 0 : index
    %c0_1 = arith.constant 0 : index
    %3 = vector.load %arg1[%c0, %c0_1] : memref<4x128xf32, #tpu.memory_space<vmem>>, vector<4x128xf32>
    %c0_2 = arith.constant 0 : index
    %c0_3 = arith.constant 0 : index
    %4 = vector.load %arg2[%c0_2, %c0_3] : memref<4x128xf32, #tpu.memory_space<vmem>>, vector<4x128xf32>
    %5 = arith.subf %3, %4 : vector<4x128xf32>
    %6 = arith.mulf %5, %5 : vector<4x128xf32>
    %c0_4 = arith.constant 0 : index
    %c0_5 = arith.constant 0 : index
    %7 = vector.load %arg3[%c0_4, %c0_5] : memref<4x128xf32, #tpu.memory_space<vmem>>, vector<4x128xf32>
    %cst = arith.constant 0.00999999977 : f32
    %8 = vector.broadcast %cst : f32 to vector<4x128xf32>
    %9 = arith.cmpf oge, %7, %8 : vector<4x128xf32>
    %cst_6 = arith.constant 0.000000e+00 : f32
    %10 = vector.broadcast %cst_6 : f32 to vector<4x128xf32>
    %11 = arith.select %9, %6, %10 : vector<4x128xi1>, vector<4x128xf32>
    %c0_7 = arith.constant 0 : index
    %c0_8 = arith.constant 0 : index
    %12 = vector.load %arg4[%c0_7, %c0_8] : memref<1x128xf32, #tpu.memory_space<vmem>>, vector<1x128xf32>
    %cst_9 = arith.constant dense<0.000000e+00> : vector<128xf32>
    %13 = vector.multi_reduction <add>, %11, %cst_9 [0] : vector<4x128xf32> to vector<128xf32>
    %14 = vector.shape_cast %13 : vector<128xf32> to vector<1x128xf32>
    %15 = arith.addf %12, %14 : vector<1x128xf32>
    %c0_10 = arith.constant 0 : index
    %c0_11 = arith.constant 0 : index
    %16 = vector.load %arg4[%c0_10, %c0_11] : memref<1x128xf32, #tpu.memory_space<vmem>>, vector<1x128xf32>
    tpu.vector_store %arg4[%c0_10, %c0_11], %15 {strides = array<i32>} : memref<1x128xf32, #tpu.memory_space<vmem>>, vector<1x128xf32>,
    %17 = arith.extui %9 : vector<4x128xi1> to vector<4x128xi32>
    %18 = arith.sitofp %17 : vector<4x128xi32> to vector<4x128xf32>
    %c0_12 = arith.constant 0 : index
    %c0_13 = arith.constant 0 : index
    %19 = vector.load %arg5[%c0_12, %c0_13] : memref<1x128xi32, #tpu.memory_space<vmem>>, vector<1x128xi32>
    %cst_14 = arith.constant dense<0.000000e+00> : vector<128xf32>
    %20 = vector.multi_reduction <add>, %18, %cst_14 [0] : vector<4x128xf32> to vector<128xf32>
    %21 = vector.shape_cast %20 : vector<128xf32> to vector<1x128xf32>
    %22 = arith.fptosi %21 : vector<1x128xf32> to vector<1x128xi32>
    %23 = arith.addi %19, %22 : vector<1x128xi32>
    %c0_15 = arith.constant 0 : index
    %c0_16 = arith.constant 0 : index
    %24 = vector.load %arg5[%c0_15, %c0_16] : memref<1x128xi32, #tpu.memory_space<vmem>>, vector<1x128xi32>
    tpu.vector_store %arg5[%c0_15, %c0_16], %23 {strides = array<i32>} : memref<1x128xi32, #tpu.memory_space<vmem>>, vector<1x128xi32>,
    return
  }
  func.func @transform_0(%arg0: i32) -> (i32, i32) {
    %c0_i32 = arith.constant 0 : i32
    %c0_i32_0 = arith.constant 0 : i32
    return %arg0, %c0_i32 : i32, i32
  }
  func.func @transform_1(%arg0: i32) -> (i32, i32) {
    %c0_i32 = arith.constant 0 : i32
    %c0_i32_0 = arith.constant 0 : i32
    return %arg0, %c0_i32 : i32, i32
  }
  func.func @transform_2(%arg0: i32) -> (i32, i32) {
    %c0_i32 = arith.constant 0 : i32
    %c0_i32_0 = arith.constant 0 : i32
    return %arg0, %c0_i32 : i32, i32
  }
  func.func @transform_3(%arg0: i32) -> (i32, i32) {
    %c0_i32 = arith.constant 0 : i32
    %c0_i32_0 = arith.constant 0 : i32
    %c0_i32_1 = arith.constant 0 : i32
    return %c0_i32, %c0_i32_0 : i32, i32
  }
  func.func @transform_4(%arg0: i32) -> (i32, i32) {
    %c0_i32 = arith.constant 0 : i32
    %c0_i32_0 = arith.constant 0 : i32
    %c0_i32_1 = arith.constant 0 : i32
    return %c0_i32, %c0_i32_0 : i32, i32
  }
}

</mosaic_0001>

<llo_original>
// kernel: tpu_custom_call.1
$region0: #{tpu_custom_call.1}
  #allocation0 [shape = 'u32[]', space=smem, size = 0x4, offset = 0x4, fixed_abs, tag = 'smem constant byte address 0x4 - core index']
  #allocation1 [shape = 'u32[144,128]{1,0:T(1,128)}', space=vmem, size = 0x12000, scoped, tag = 'internal scratch']
  %s0 = inlined_call_operand.hbm [shape: f32[4,128], index: 0, kind: input, shape index: {}]
  %s1 = inlined_call_operand.hbm [shape: f32[4,128], index: 1, kind: input, shape index: {}]
  %s2 = inlined_call_operand.vmem [shape: f32[4,128], index: 2, kind: input, shape index: {}]
  %s3 = inlined_call_operand.hbm [shape: f32[1,128], index: 3, kind: output, shape index: {0}]
  %s4 = inlined_call_operand.hbm [shape: s32[1,128], index: 4, kind: output, shape index: {1}]
  %5 = xla_tuple %s3, %s4
  %s6 = sld [smem:[#allocation0]]
  $region42: #{tpu_custom_call.1} parent=0
    _
  %s8 = ssub.s32 1, %s6
  %s9 = scalar_select 0, %s8, %s6
  $region1: #{tpu_custom_call.1} parent=0
    #allocation2 [shape = 'u8[2048]{0}', space=vmem, size = 0x800, scoped, tag = 'input window, operand 0, single buffered']
    #allocation3 [shape = 's32[1]{0}', space=sflag, size = 0x4, scoped, tag = 'scoped memory for tpu_custom_call.1']
    #allocation4 [shape = 's32[1]{0}', space=sflag, size = 0x4, scoped, tag = 'scoped memory for tpu_custom_call.1']
    #allocation5 [shape = 'u8[2048]{0}', space=vmem, size = 0x800, scoped, tag = 'input window, operand 1, single buffered']
    #allocation6 [shape = 's32[1]{0}', space=sflag, size = 0x4, scoped, tag = 'scoped memory for tpu_custom_call.1']
    #allocation7 [shape = 'u8[512]{0}', space=vmem, size = 0x400, scoped, tag = 'output window, operand 0, single buffered']
    #allocation8 [shape = 'u8[512]{0}', space=vmem, size = 0x400, scoped, tag = 'output window, operand 1, single buffered']
    #allocation9 [shape = 's32[1]{0}', space=sflag, size = 0x4, scoped, tag = 'scoped memory for tpu_custom_call.1']
    %10 = vsyncpa [#allocation3], 0
    %11 = vsyncpa [#allocation6], 0
    %12 = vsyncpa [#allocation4], 0
    %13 = vsyncpa [#allocation9], 0
    // Predicated region
    $region2: #{tpu_custom_call.1} parent=1 // pred_check
      _
    $region3: #{tpu_custom_call.1} parent=1 // pred_check_branch
      %15 = sbr.rel (0) target = $region5
    $region4: #{tpu_custom_call.1} parent=1 // pred_region
      %s17 = ssub.s32 64, 64
      %18 = vsyncadd [#allocation3], %s17
      %s20 = sshll.u32 [#allocation2], 4
      %s21 = int_to_ptr.vmem [resolvable:$true] %s20
      %23 = dma.hbm_to_vmem [thread:$0]  %s0, 64, %s21, [#allocation3]
    $region5: #{tpu_custom_call.1} parent=1 // pred_fallthru
      _
    // Predicated region
    $region6: #{tpu_custom_call.1} parent=1 // pred_check
      _
    $region7: #{tpu_custom_call.1} parent=1 // pred_check_branch
      %25 = sbr.rel (0) target = $region9
    $region8: #{tpu_custom_call.1} parent=1 // pred_region
      %s27 = ssub.s32 64, 64
      %28 = vsyncadd [#allocation6], %s27
      %s30 = sshll.u32 [#allocation5], 4
      %s31 = int_to_ptr.vmem [resolvable:$true] %s30
      %33 = dma.hbm_to_vmem [thread:$0]  %s1, 64, %s31, [#allocation6]
    $region9: #{tpu_custom_call.1} parent=1 // pred_fallthru
      _
    // Predicated region
    $region10: #{tpu_custom_call.1} parent=1 // pred_check
      _
    $region11: #{tpu_custom_call.1} parent=1 // pred_check_branch
      %35 = sbr.rel (0) target = $region13
    $region12: #{tpu_custom_call.1} parent=1 // pred_region
      _
    $region13: #{tpu_custom_call.1} parent=1 // pred_fallthru
      _
    // Predicated region
    $region14: #{tpu_custom_call.1} parent=1 // pred_check
      _
    $region15: #{tpu_custom_call.1} parent=1 // pred_check_branch
      %37 = sbr.rel (0) target = $region17
    $region16: #{tpu_custom_call.1} parent=1 // pred_region
      %38 = dma.done [#allocation3], 64
    $region17: #{tpu_custom_call.1} parent=1 // pred_fallthru
      _
    // Predicated region
    $region18: #{tpu_custom_call.1} parent=1 // pred_check
      _
    $region19: #{tpu_custom_call.1} parent=1 // pred_check_branch
      %40 = sbr.rel (0) target = $region21
    $region20: #{tpu_custom_call.1} parent=1 // pred_region
      %41 = dma.done [#allocation6], 64
    $region21: #{tpu_custom_call.1} parent=1 // pred_fallthru
      _
    %p42 = scmp.eq.s32.totalorder 0, 0
    // Predicated region
    $region22: #{tpu_custom_call.1} parent=1 // pred_check
      %p43 = pneg %p42
    $region23: #{tpu_custom_call.1} parent=1 // pred_check_branch
      %45 = sbr.rel (%p43) target = $region25
    $region24: #{tpu_custom_call.1} parent=1 // pred_region
      %46 = vst [vmem:[#allocation7] sm:$0x1] 0.0
      %47 = vst [vmem:[#allocation8] sm:$0x1] 0
    $region25: #{tpu_custom_call.1} parent=1 // pred_fallthru
      _
    %v48 = vld [vmem:[#allocation2] sm:$0xf]
    %v49 = vld [vmem:[#allocation5] sm:$0xf]
    %v50 = vsub.f32 %v48, %v49
    %v51 = vmul.f32 %v50, %v50
    %v52 = vld [vmem:[%s2] sm:$0xf]
    %vm53 = vcmp.ge.f32.partialorder %v52, 0.01
    %v54 = vsel %vm53, %v51, 0.0
    %v55 = vld [vmem:[#allocation7] sm:$0x1]
    %vm56 = vcmask 1043456
    %v57 = vsel %vm56, %v54, 0.0
    %v58 = vrot.slane %v57, 4
    %v59 = vadd.f32 %v57, %v58
    %v60 = vrot.slane %v59, 2
    %v61 = vadd.f32 %v59, %v60
    %v62 = vrot.slane %v61, 1
    %v63 = vadd.f32 %v61, %v62
    %v64 = vadd.f32 %v55, %v63
    %65 = vst [vmem:[#allocation7] sm:$0x1] %v64
    %v66 = vsel %vm53, 1, 0
    %v67 = vcvt.s32.f32 %v66
    %v68 = vld [vmem:[#allocation8] sm:$0x1]
    %v69 = vsel %vm56, %v67, 0.0
    %v70 = vrot.slane %v69, 4
    %v71 = vadd.f32 %v69, %v70
    %v72 = vrot.slane %v71, 2
    %v73 = vadd.f32 %v71, %v72
    %v74 = vrot.slane %v73, 1
    %v75 = vadd.f32 %v73, %v74
    %v76 = vcvt.f32.s32.to.zero.pseudo %v75
    %v77 = vadd.s32 %v68, %v76
    %78 = vst [vmem:[#allocation8] sm:$0x1] %v77
    // Predicated region
    $region26: #{tpu_custom_call.1} parent=1 // pred_check
      _
    $region27: #{tpu_custom_call.1} parent=1 // pred_check_branch
      %80 = sbr.rel (0) target = $region29
    $region28: #{tpu_custom_call.1} parent=1 // pred_region
      %s82 = ssub.s32 16, 16
      %83 = vsyncadd [#allocation4], %s82
      %s85 = sshll.u32 [#allocation7], 4
      %s86 = int_to_ptr.vmem [resolvable:$true] %s85
      %88 = dma.vmem_to_hbm [thread:$0]  %s86, 16, %s3, [#allocation4]
    $region29: #{tpu_custom_call.1} parent=1 // pred_fallthru
      _
    // Predicated region
    $region30: #{tpu_custom_call.1} parent=1 // pred_check
      _
    $region31: #{tpu_custom_call.1} parent=1 // pred_check_branch
      %90 = sbr.rel (0) target = $region33
    $region32: #{tpu_custom_call.1} parent=1 // pred_region
      %s92 = ssub.s32 16, 16
      %93 = vsyncadd [#allocation9], %s92
      %s95 = sshll.u32 [#allocation8], 4
      %s96 = int_to_ptr.vmem [resolvable:$true] %s95
      %98 = dma.vmem_to_hbm [thread:$0]  %s96, 16, %s4, [#allocation9]
    $region33: #{tpu_custom_call.1} parent=1 // pred_fallthru
      _
    // Predicated region
    $region34: #{tpu_custom_call.1} parent=1 // pred_check
      _
    $region35: #{tpu_custom_call.1} parent=1 // pred_check_branch
      %100 = sbr.rel (0) target = $region37
    $region36: #{tpu_custom_call.1} parent=1 // pred_region
      %101 = dma.done [#allocation4], 16
    $region37: #{tpu_custom_call.1} parent=1 // pred_fallthru
      _
    // Predicated region
    $region38: #{tpu_custom_call.1} parent=1 // pred_check
      _
    $region39: #{tpu_custom_call.1} parent=1 // pred_check_branch
      %103 = sbr.rel (0) target = $region41
    $region40: #{tpu_custom_call.1} parent=1 // pred_region
      %104 = dma.done [#allocation9], 16
    $region41: #{tpu_custom_call.1} parent=1 // pred_fallthru
      _
    %105 = vsyncpa [#allocation3], 1
    %106 = vsyncpa [#allocation6], 1
    %107 = vsyncpa [#allocation4], 1
    %108 = vsyncpa [#allocation9], 1

</llo_original>
